<compile_context>
chip_gen: v6e
topology: v6e:2x2x1
jax: 0.10.0
libtpu: 0.0.40
codegen_flags: <defaults>
</compile_context>

<pallas_src>
import functools

import jax
import jax.numpy as jnp
import numpy as np
from jax.experimental import pallas as pl
from jax.experimental.pallas import tpu as pltpu

SUB = 8      # query-row sub-tile inside the kernel (one sublane group)
CPAD = 8     # coordinate dim padded 3 -> 8 (zero padding, distances unchanged)
NCOORD = 3   # real coordinate count


def _round_up(a, b):
    return (a + b - 1) // b * b


def _pick_tq(ny):
    """Query-row tile: multiple of 8, <= 128 rows, prefers >= 2 grid steps
    (keeps both v7x TensorCores busy) and caps query-padding waste."""
    ny8 = _round_up(max(ny, SUB), SUB)
    if ny8 <= SUB:
        return SUB
    ntiles = max(2, pl.cdiv(ny8, 128))
    return min(128, _round_up(pl.cdiv(ny8, ntiles), SUB))


def _vmem_limit_bytes():
    cap = 128 * 1024 * 1024
    try:
        cap = int(getattr(pltpu.get_tpu_info(), "vmem_capacity_bytes", cap))
    except Exception:
        pass
    # 48 MiB on 128 MiB chips (v5e/v6e), ~28 MiB on v7x's 64 MiB per TC.
    return max(16 * 1024 * 1024, min(48 * 1024 * 1024, (cap * 45) // 100))


# ----------------------------------------------------------------------------
# Fused kernel: per query-row tile
#   1) exact (SUB, NX) squared distances per 8-row sub-tile (VPU),
#   2) cross-batch masking,
#   3) k-nearest extraction (index + Euclidean distance) by iterative min
#      with exact lowest-index tie-break, register-resident,
#   4) lane-parallel edge MLP relu(relu(d*W1+b1)@W2+b2) on the (TQ, k) tile.
# ----------------------------------------------------------------------------
def _knn_edge_kernel(k, nx, tq,
                     pos_y_ref, by_ref, pos_xt_ref, bx_ref,
                     w1_ref, b1_ref, w2_ref, b2_ref,
                     idx_ref, dist_ref, wgt_ref):
    big = jnp.float32(1e30)

    # ---- knn over 8-row query sub-tiles (keeps d2 register-resident) ----
    @pl.loop(0, tq // SUB)
    def _(r):
        roff = pl.multiple_of(r * SUB, SUB)
        y = pos_y_ref[pl.ds(roff, SUB), :]                    # (SUB, CPAD)
        by = by_ref[pl.ds(roff, SUB), :]                      # (SUB, 1)
        bx = bx_ref[...]                                      # (1, NX)

        # Exact squared distances on the VPU: sum_c (y_c - x_c)^2.
        d2 = None
        for c in range(NCOORD):
            diff = y[:, c:c + 1] - pos_xt_ref[c:c + 1, :]     # (SUB, NX)
            sq = diff * diff
            d2 = sq if d2 is None else d2 + sq
        d2 = jnp.where(by == bx, d2, big)                     # mask cross-batch

        cols = jax.lax.broadcasted_iota(jnp.int32, (1, nx), 1)  # row iota only
        idx_cols = []
        dist_cols = []
        for _ in range(k):                                    # k small & static
            m = jnp.min(d2, axis=-1, keepdims=True)           # (SUB, 1)
            am = jnp.min(jnp.where(d2 == m, cols, nx), axis=-1, keepdims=True)
            idx_cols.append(am)
            dist_cols.append(jnp.sqrt(m))
            # invalidate only the chosen column -> exact lowest-index tie-break
            d2 = jnp.where(cols == am, big, d2)

        idx_ref[pl.ds(roff, SUB), :] = jnp.concatenate(idx_cols, axis=-1)
        dist_ref[pl.ds(roff, SUB), :] = jnp.concatenate(dist_cols, axis=-1)

    # ---- fused lane-parallel edge MLP: relu(relu(d*W1+b1)@W2+b2) ----
    dist = dist_ref[...]                                      # (TQ, k)
    w1 = w1_ref[...]                                          # (1, H)
    b1 = b1_ref[...]                                          # (1, H)
    w2 = w2_ref[...]                                          # (1, H)
    b2 = b2_ref[0]                                            # scalar (SMEM)
    wcols = []
    for j in range(k):
        d_col = dist[:, j:j + 1]                              # (TQ, 1)
        h = jnp.maximum(d_col * w1 + b1, 0.0)                 # (TQ, H)
        s = jnp.sum(h * w2, axis=-1, keepdims=True) + b2      # (TQ, 1)
        wcols.append(jnp.maximum(s, 0.0))
    wgt_ref[...] = jnp.concatenate(wcols, axis=-1)


def knn_edge_pallas(pos_y, by, pos_x, bx, k, w1, b1, w2, b2):
    """Returns (neighbor column indices (Ny,k) i32, distances (Ny,k) f32,
    edge weights (Ny,k) f32)."""
    ny = pos_y.shape[0]
    nx = pos_x.shape[0]
    hidden = w1.shape[0]
    tq = _pick_tq(ny)
    ny_pad = _round_up(max(ny, tq), tq)
    nx_pad = _round_up(max(nx, 128), 128)
    # TODO(synk): for very large candidate sets (NX), add an NX grid axis with
    # running k-best (value, index) accumulators in VMEM scratch instead of
    # the monolithic (CPAD, NX) reference block (needed for v7x's 64 MiB VMEM).

    pos_y_p = jnp.zeros((ny_pad, CPAD), jnp.float32).at[:ny, :NCOORD].set(pos_y)
    pos_xt_p = jnp.zeros((CPAD, nx_pad), jnp.float32).at[:NCOORD, :nx].set(pos_x.T)
    # padded queries get batch -2, padded refs get batch -1 -> never matched
    by_p = jnp.full((ny_pad, 1), -2, jnp.int32).at[:ny, 0].set(by)
    bx_p = jnp.full((1, nx_pad), -1, jnp.int32).at[0, :nx].set(bx)

    w1_r = w1.reshape(1, hidden).astype(jnp.float32)
    b1_r = b1.reshape(1, hidden).astype(jnp.float32)
    w2_r = w2.reshape(1, hidden).astype(jnp.float32)
    b2_r = b2.reshape(1).astype(jnp.float32)

    grid = (ny_pad // tq,)
    idx, dist, wgt = pl.pallas_call(
        functools.partial(_knn_edge_kernel, k, nx_pad, tq),
        out_shape=(jax.ShapeDtypeStruct((ny_pad, k), jnp.int32),
                   jax.ShapeDtypeStruct((ny_pad, k), jnp.float32),
                   jax.ShapeDtypeStruct((ny_pad, k), jnp.float32)),
        grid_spec=pltpu.PrefetchScalarGridSpec(
            num_scalar_prefetch=0,
            grid=grid,
            in_specs=[
                pl.BlockSpec((tq, CPAD), lambda i: (i, 0)),
                pl.BlockSpec((tq, 1), lambda i: (i, 0)),
                pl.BlockSpec((CPAD, nx_pad), lambda i: (0, 0)),
                pl.BlockSpec((1, nx_pad), lambda i: (0, 0)),
                pl.BlockSpec((1, hidden), lambda i: (0, 0)),        # w1 row
                pl.BlockSpec((1, hidden), lambda i: (0, 0)),        # b1 row
                pl.BlockSpec((1, hidden), lambda i: (0, 0)),        # w2 row
                pl.BlockSpec(memory_space=pltpu.MemorySpace.SMEM),  # b2 (1,)
            ],
            out_specs=[
                pl.BlockSpec((tq, k), lambda i: (i, 0)),
                pl.BlockSpec((tq, k), lambda i: (i, 0)),
                pl.BlockSpec((tq, k), lambda i: (i, 0)),
            ],
        ),
        compiler_params=pltpu.CompilerParams(
            dimension_semantics=("parallel",),
            vmem_limit_bytes=_vmem_limit_bytes()),
    )(pos_y_p, by_p, pos_xt_p, bx_p, w1_r, b1_r, w2_r, b2_r)
    return idx[:ny], dist[:ny], wgt[:ny]


# ----------------------------------------------------------------------------
# Module forward (glue in plain JAX)
# ----------------------------------------------------------------------------
def positional_edge_generator(pos, x_subset, y_subset, k, batch, params):
    """Returns (edge_index (2, Ny*k) i32, edge_weights (Ny*k, 1) f32,
    node_distances (Ny*k, 1) f32)."""
    # TODO(synk): PyG knn drops queries with < k same-batch candidates, giving
    # a variable edge count; here we emit a fixed Ny*k edges (assumes >= k
    # candidates per batch).
    w1, b1, w2, b2 = params
    pos = pos.astype(jnp.float32)
    pos_x = pos[x_subset]
    pos_y = pos[y_subset]
    bx = batch[x_subset].astype(jnp.int32)
    by = batch[y_subset].astype(jnp.int32)

    nbr_cols, nbr_dist, nbr_wgt = knn_edge_pallas(
        pos_y, by, pos_x, bx, k, w1, b1, w2, b2)             # (Ny, k) each

    ny = y_subset.shape[0]
    conn0 = jnp.repeat(jnp.arange(ny, dtype=jnp.int32), k)   # index into y_subset
    conn1 = nbr_cols.reshape(-1)                              # index into x_subset
    edge_index = jnp.stack([y_subset[conn0], x_subset[conn1]], axis=0)

    node_distances = nbr_dist.reshape(-1)                     # ||pos[e0]-pos[e1]||
    edge_weights = nbr_wgt.reshape(-1, 1)
    return edge_index, edge_weights, node_distances.reshape(-1, 1)


# ----------------------------------------------------------------------------
if __name__ == "__main__":
    key = jax.random.PRNGKey(0)
    k_pos, k_w1, k_b1, k_w2, k_b2 = jax.random.split(key, 5)

    # small shapes consistent with the module
    n_nodes = 16
    hidden_dim = 32
    k = 4

    pos = jax.random.normal(k_pos, (n_nodes, 3), dtype=jnp.float32)
    batch = jnp.concatenate([jnp.zeros(8, jnp.int32), jnp.ones(8, jnp.int32)])
    x_subset = jnp.arange(n_nodes, dtype=jnp.int32)                # candidates
    y_subset = jnp.arange(0, n_nodes, 2, dtype=jnp.int32)          # 8 queries

    # deterministic MLP params: Linear(1,H) -> ReLU -> Linear(H,1) -> ReLU
    w1 = jax.random.uniform(k_w1, (hidden_dim,), jnp.float32, -1.0, 1.0)
    b1 = jax.random.uniform(k_b1, (hidden_dim,), jnp.float32, -1.0, 1.0)
    w2 = jax.random.uniform(k_w2, (hidden_dim,), jnp.float32, -1.0, 1.0)
    b2 = jax.random.uniform(k_b2, (1,), jnp.float32, -1.0, 1.0)
    params = (w1, b1, w2, b2)

    edge_index, edge_weights, node_dists = positional_edge_generator(
        pos, x_subset, y_subset, k, batch, params)
    jax.block_until_ready(edge_weights)

    # ------------------ pure numpy reference (same tie-breaking) -------------
    pos_np = np.asarray(pos)
    bx_np = np.asarray(batch[x_subset])
    by_np = np.asarray(batch[y_subset])
    py = pos_np[np.asarray(y_subset)]
    px = pos_np[np.asarray(x_subset)]
    d2 = ((py[:, None, :] - px[None, :, :]) ** 2).sum(-1)
    d2 = np.where(by_np[:, None] == bx_np[None, :], d2, 1e30)
    ref_idx = np.zeros((py.shape[0], k), np.int32)
    ref_d = np.zeros((py.shape[0], k), np.float32)
    work = d2.copy()
    for kk in range(k):
        am = work.argmin(axis=1)
        ref_idx[:, kk] = am
        ref_d[:, kk] = np.sqrt(work[np.arange(py.shape[0]), am])
        work[np.arange(py.shape[0]), am] = 1e30
    ref_edge_index = np.stack(
        [np.asarray(y_subset)[np.repeat(np.arange(py.shape[0]), k)],
         np.asarray(x_subset)[ref_idx.reshape(-1)]], axis=0)
    dref = ref_d.reshape(-1, 1)
    ref_w = np.maximum(
        np.maximum(dref * np.asarray(w1)[None, :] + np.asarray(b1)[None, :], 0.0)
        @ np.asarray(w2)[:, None] + np.asarray(b2), 0.0)

    assert np.array_equal(np.asarray(edge_index), ref_edge_index)
    assert np.allclose(np.asarray(node_dists), dref, atol=1e-4)
    assert np.allclose(np.asarray(edge_weights), ref_w, atol=1e-3, rtol=1e-3)

    print("KERNEL_OK")
</pallas_src>

<mosaic_0001>
module attributes {stable_mosaic.version = 11 : i64} {
  func.func @_knn_edge_kernel(%arg0: i32, %arg1: memref<8x8xf32, #tpu.memory_space<vmem>>, %arg2: memref<8x1xi32, #tpu.memory_space<vmem>>, %arg3: memref<8x128xf32, #tpu.memory_space<vmem>>, %arg4: memref<1x128xi32, #tpu.memory_space<vmem>>, %arg5: memref<1x32xf32, #tpu.memory_space<vmem>>, %arg6: memref<1x32xf32, #tpu.memory_space<vmem>>, %arg7: memref<1x32xf32, #tpu.memory_space<vmem>>, %arg8: memref<1xf32, #tpu.memory_space<smem>>, %arg9: memref<8x4xi32, #tpu.memory_space<vmem>>, %arg10: memref<8x4xf32, #tpu.memory_space<vmem>>, %arg11: memref<8x4xf32, #tpu.memory_space<vmem>>) attributes {dimension_semantics = [#tpu.dimension_semantics<parallel>], iteration_bounds = array<i64: 1>, scalar_prefetch = 0 : i64, scratch_operands = 0 : i64, tpu.core_type = #tpu.core_type<tc>, window_params = [{transform_indices = @transform_0, window_bounds = array<i64: 8, 8>}, {transform_indices = @transform_1, window_bounds = array<i64: 8, 1>}, {pipeline_mode = #tpu.pipeline_mode<synchronous>, transform_indices = @transform_2, window_bounds = array<i64: 8, 128>}, {pipeline_mode = #tpu.pipeline_mode<synchronous>, transform_indices = @transform_3, window_bounds = array<i64: 1, 128>}, {pipeline_mode = #tpu.pipeline_mode<synchronous>, transform_indices = @transform_4, window_bounds = array<i64: 1, 32>}, {pipeline_mode = #tpu.pipeline_mode<synchronous>, transform_indices = @transform_5, window_bounds = array<i64: 1, 32>}, {pipeline_mode = #tpu.pipeline_mode<synchronous>, transform_indices = @transform_6, window_bounds = array<i64: 1, 32>}, {transform_indices = @transform_7, window_bounds = array<i64: 1>}, {transform_indices = @transform_8, window_bounds = array<i64: 8, 4>}, {transform_indices = @transform_9, window_bounds = array<i64: 8, 4>}, {transform_indices = @transform_10, window_bounds = array<i64: 8, 4>}]} {
    %cst = arith.constant 1.000000e+30 : f32
    %c0_i32 = arith.constant 0 : i32
    %c1_i32 = arith.constant 1 : i32
    %0 = arith.muli %c0_i32, %c1_i32 : i32
    %c0_i32_0 = arith.constant 0 : i32
    %1 = arith.addi %c0_i32_0, %0 : i32
    %c8_i32 = arith.constant 8 : i32
    %2 = arith.muli %1, %c8_i32 : i32
    %3 = tpu.assume_multiple %2, 8 : i32
    %4 = arith.index_cast %3 : i32 to index
    %c0 = arith.constant 0 : index
    %5 = vector.load %arg1[%4, %c0] : memref<8x8xf32, #tpu.memory_space<vmem>>, vector<8x8xf32>
    %6 = arith.index_cast %3 : i32 to index
    %c0_1 = arith.constant 0 : index
    %7 = vector.load %arg2[%6, %c0_1] : memref<8x1xi32, #tpu.memory_space<vmem>>, vector<8x1xi32>
    %c0_2 = arith.constant 0 : index
    %c0_3 = arith.constant 0 : index
    %8 = vector.load %arg4[%c0_2, %c0_3] : memref<1x128xi32, #tpu.memory_space<vmem>>, vector<1x128xi32>
    %9 = vector.extract_strided_slice %5 {offsets = [0, 0], sizes = [8, 1], strides = [1, 1]} : vector<8x8xf32> to vector<8x1xf32>
    %c0_4 = arith.constant 0 : index
    %c0_5 = arith.constant 0 : index
    %10 = vector.load %arg3[%c0_4, %c0_5] : memref<8x128xf32, #tpu.memory_space<vmem>>, vector<1x128xf32>
    %11 = vector.broadcast %9 : vector<8x1xf32> to vector<8x128xf32>
    %12 = vector.broadcast %10 : vector<1x128xf32> to vector<8x128xf32>
    %13 = arith.subf %11, %12 : vector<8x128xf32>
    %14 = arith.mulf %13, %13 : vector<8x128xf32>
    %15 = vector.extract_strided_slice %5 {offsets = [0, 1], sizes = [8, 1], strides = [1, 1]} : vector<8x8xf32> to vector<8x1xf32>
    %c1 = arith.constant 1 : index
    %c0_6 = arith.constant 0 : index
    %16 = vector.load %arg3[%c1, %c0_6] : memref<8x128xf32, #tpu.memory_space<vmem>>, vector<1x128xf32>
    %17 = vector.broadcast %15 : vector<8x1xf32> to vector<8x128xf32>
    %18 = vector.broadcast %16 : vector<1x128xf32> to vector<8x128xf32>
    %19 = arith.subf %17, %18 : vector<8x128xf32>
    %20 = arith.mulf %19, %19 : vector<8x128xf32>
    %21 = arith.addf %14, %20 : vector<8x128xf32>
    %22 = vector.extract_strided_slice %5 {offsets = [0, 2], sizes = [8, 1], strides = [1, 1]} : vector<8x8xf32> to vector<8x1xf32>
    %c2 = arith.constant 2 : index
    %c0_7 = arith.constant 0 : index
    %23 = vector.load %arg3[%c2, %c0_7] : memref<8x128xf32, #tpu.memory_space<vmem>>, vector<1x128xf32>
    %24 = vector.broadcast %22 : vector<8x1xf32> to vector<8x128xf32>
    %25 = vector.broadcast %23 : vector<1x128xf32> to vector<8x128xf32>
    %26 = arith.subf %24, %25 : vector<8x128xf32>
    %27 = arith.mulf %26, %26 : vector<8x128xf32>
    %28 = arith.addf %21, %27 : vector<8x128xf32>
    %29 = vector.broadcast %7 : vector<8x1xi32> to vector<8x128xi32>
    %30 = vector.broadcast %8 : vector<1x128xi32> to vector<8x128xi32>
    %31 = arith.cmpi eq, %29, %30 : vector<8x128xi32>
    %32 = vector.broadcast %cst : f32 to vector<8x128xf32>
    %33 = arith.select %31, %28, %32 : vector<8x128xi1>, vector<8x128xf32>
    %34 = tpu.iota {dimensions = array<i32: 1>} : vector<1x128xi32>
    %cst_8 = arith.constant dense<0x7F800000> : vector<8xf32>
    %35 = vector.multi_reduction <minimumf>, %33, %cst_8 [1] : vector<8x128xf32> to vector<8xf32>
    %36 = vector.shape_cast %35 : vector<8xf32> to vector<8x1xf32>
    %37 = vector.broadcast %36 : vector<8x1xf32> to vector<8x128xf32>
    %38 = arith.cmpf oeq, %33, %37 : vector<8x128xf32>
    %c128_i32 = arith.constant 128 : i32
    %39 = vector.shape_cast %34 : vector<1x128xi32> to vector<1x128xi32>
    %40 = vector.broadcast %39 : vector<1x128xi32> to vector<8x128xi32>
    %41 = vector.broadcast %c128_i32 : i32 to vector<8x128xi32>
    %42 = arith.select %38, %40, %41 : vector<8x128xi1>, vector<8x128xi32>
    %cst_9 = arith.constant dense<2147483647> : vector<8xi32>
    %43 = vector.multi_reduction <minsi>, %42, %cst_9 [1] : vector<8x128xi32> to vector<8xi32>
    %44 = vector.shape_cast %43 : vector<8xi32> to vector<8x1xi32>
    %45 = math.sqrt %36 : vector<8x1xf32>
    %46 = vector.broadcast %34 : vector<1x128xi32> to vector<8x128xi32>
    %47 = vector.broadcast %44 : vector<8x1xi32> to vector<8x128xi32>
    %48 = arith.cmpi eq, %46, %47 : vector<8x128xi32>
    %49 = vector.broadcast %cst : f32 to vector<8x128xf32>
    %50 = arith.select %48, %49, %33 : vector<8x128xi1>, vector<8x128xf32>
    %cst_10 = arith.constant dense<0x7F800000> : vector<8xf32>
    %51 = vector.multi_reduction <minimumf>, %50, %cst_10 [1] : vector<8x128xf32> to vector<8xf32>
    %52 = vector.shape_cast %51 : vector<8xf32> to vector<8x1xf32>
    %53 = vector.broadcast %52 : vector<8x1xf32> to vector<8x128xf32>
    %54 = arith.cmpf oeq, %50, %53 : vector<8x128xf32>
    %c128_i32_11 = arith.constant 128 : i32
    %55 = vector.shape_cast %34 : vector<1x128xi32> to vector<1x128xi32>
    %56 = vector.broadcast %55 : vector<1x128xi32> to vector<8x128xi32>
    %57 = vector.broadcast %c128_i32_11 : i32 to vector<8x128xi32>
    %58 = arith.select %54, %56, %57 : vector<8x128xi1>, vector<8x128xi32>
    %cst_12 = arith.constant dense<2147483647> : vector<8xi32>
    %59 = vector.multi_reduction <minsi>, %58, %cst_12 [1] : vector<8x128xi32> to vector<8xi32>
    %60 = vector.shape_cast %59 : vector<8xi32> to vector<8x1xi32>
    %61 = math.sqrt %52 : vector<8x1xf32>
    %62 = vector.broadcast %34 : vector<1x128xi32> to vector<8x128xi32>
    %63 = vector.broadcast %60 : vector<8x1xi32> to vector<8x128xi32>
    %64 = arith.cmpi eq, %62, %63 : vector<8x128xi32>
    %65 = vector.broadcast %cst : f32 to vector<8x128xf32>
    %66 = arith.select %64, %65, %50 : vector<8x128xi1>, vector<8x128xf32>
    %cst_13 = arith.constant dense<0x7F800000> : vector<8xf32>
    %67 = vector.multi_reduction <minimumf>, %66, %cst_13 [1] : vector<8x128xf32> to vector<8xf32>
    %68 = vector.shape_cast %67 : vector<8xf32> to vector<8x1xf32>
    %69 = vector.broadcast %68 : vector<8x1xf32> to vector<8x128xf32>
    %70 = arith.cmpf oeq, %66, %69 : vector<8x128xf32>
    %c128_i32_14 = arith.constant 128 : i32
    %71 = vector.shape_cast %34 : vector<1x128xi32> to vector<1x128xi32>
    %72 = vector.broadcast %71 : vector<1x128xi32> to vector<8x128xi32>
    %73 = vector.broadcast %c128_i32_14 : i32 to vector<8x128xi32>
    %74 = arith.select %70, %72, %73 : vector<8x128xi1>, vector<8x128xi32>
    %cst_15 = arith.constant dense<2147483647> : vector<8xi32>
    %75 = vector.multi_reduction <minsi>, %74, %cst_15 [1] : vector<8x128xi32> to vector<8xi32>
    %76 = vector.shape_cast %75 : vector<8xi32> to vector<8x1xi32>
    %77 = math.sqrt %68 : vector<8x1xf32>
    %78 = vector.broadcast %34 : vector<1x128xi32> to vector<8x128xi32>
    %79 = vector.broadcast %76 : vector<8x1xi32> to vector<8x128xi32>
    %80 = arith.cmpi eq, %78, %79 : vector<8x128xi32>
    %81 = vector.broadcast %cst : f32 to vector<8x128xf32>
    %82 = arith.select %80, %81, %66 : vector<8x128xi1>, vector<8x128xf32>
    %cst_16 = arith.constant dense<0x7F800000> : vector<8xf32>
    %83 = vector.multi_reduction <minimumf>, %82, %cst_16 [1] : vector<8x128xf32> to vector<8xf32>
    %84 = vector.shape_cast %83 : vector<8xf32> to vector<8x1xf32>
    %85 = vector.broadcast %84 : vector<8x1xf32> to vector<8x128xf32>
    %86 = arith.cmpf oeq, %82, %85 : vector<8x128xf32>
    %c128_i32_17 = arith.constant 128 : i32
    %87 = vector.shape_cast %34 : vector<1x128xi32> to vector<1x128xi32>
    %88 = vector.broadcast %87 : vector<1x128xi32> to vector<8x128xi32>
    %89 = vector.broadcast %c128_i32_17 : i32 to vector<8x128xi32>
    %90 = arith.select %86, %88, %89 : vector<8x128xi1>, vector<8x128xi32>
    %cst_18 = arith.constant dense<2147483647> : vector<8xi32>
    %91 = vector.multi_reduction <minsi>, %90, %cst_18 [1] : vector<8x128xi32> to vector<8xi32>
    %92 = vector.shape_cast %91 : vector<8xi32> to vector<8x1xi32>
    %93 = math.sqrt %84 : vector<8x1xf32>
    %94 = tpu.concatenate %44, %60, %76, %92 in 1 : vector<8x1xi32>, vector<8x1xi32>, vector<8x1xi32>, vector<8x1xi32> -> vector<8x4xi32>
    %95 = arith.index_cast %3 : i32 to index
    %c0_19 = arith.constant 0 : index
    %96 = vector.load %arg9[%95, %c0_19] : memref<8x4xi32, #tpu.memory_space<vmem>>, vector<8x4xi32>
    tpu.vector_store %arg9[%95, %c0_19], %94 {strides = array<i32>} : memref<8x4xi32, #tpu.memory_space<vmem>>, vector<8x4xi32>,
    %97 = tpu.concatenate %45, %61, %77, %93 in 1 : vector<8x1xf32>, vector<8x1xf32>, vector<8x1xf32>, vector<8x1xf32> -> vector<8x4xf32>
    %98 = arith.index_cast %3 : i32 to index
    %c0_20 = arith.constant 0 : index
    %99 = vector.load %arg10[%98, %c0_20] : memref<8x4xf32, #tpu.memory_space<vmem>>, vector<8x4xf32>
    tpu.vector_store %arg10[%98, %c0_20], %97 {strides = array<i32>} : memref<8x4xf32, #tpu.memory_space<vmem>>, vector<8x4xf32>,
    %c1_i32_21 = arith.constant 1 : i32
    %c0_22 = arith.constant 0 : index
    %c0_23 = arith.constant 0 : index
    %100 = vector.load %arg10[%c0_22, %c0_23] : memref<8x4xf32, #tpu.memory_space<vmem>>, vector<8x4xf32>
    %c0_24 = arith.constant 0 : index
    %c0_25 = arith.constant 0 : index
    %101 = vector.load %arg5[%c0_24, %c0_25] : memref<1x32xf32, #tpu.memory_space<vmem>>, vector<1x32xf32>
    %c0_26 = arith.constant 0 : index
    %c0_27 = arith.constant 0 : index
    %102 = vector.load %arg6[%c0_26, %c0_27] : memref<1x32xf32, #tpu.memory_space<vmem>>, vector<1x32xf32>
    %c0_28 = arith.constant 0 : index
    %c0_29 = arith.constant 0 : index
    %103 = vector.load %arg7[%c0_28, %c0_29] : memref<1x32xf32, #tpu.memory_space<vmem>>, vector<1x32xf32>
    %c0_30 = arith.constant 0 : index
    %104 = memref.load %arg8[%c0_30] : memref<1xf32, #tpu.memory_space<smem>>
    %105 = vector.extract_strided_slice %100 {offsets = [0, 0], sizes = [8, 1], strides = [1, 1]} : vector<8x4xf32> to vector<8x1xf32>
    %106 = vector.broadcast %105 : vector<8x1xf32> to vector<8x32xf32>
    %107 = vector.broadcast %101 : vector<1x32xf32> to vector<8x32xf32>
    %108 = arith.mulf %106, %107 : vector<8x32xf32>
    %109 = vector.broadcast %102 : vector<1x32xf32> to vector<8x32xf32>
    %110 = arith.addf %108, %109 : vector<8x32xf32>
    %cst_31 = arith.constant 0.000000e+00 : f32
    %111 = vector.broadcast %cst_31 : f32 to vector<8x32xf32>
    %112 = arith.maximumf %110, %111 : vector<8x32xf32>
    %113 = vector.broadcast %103 : vector<1x32xf32> to vector<8x32xf32>
    %114 = arith.mulf %112, %113 : vector<8x32xf32>
    %cst_32 = arith.constant dense<0.000000e+00> : vector<8xf32>
    %115 = vector.multi_reduction <add>, %114, %cst_32 [1] : vector<8x32xf32> to vector<8xf32>
    %116 = vector.shape_cast %115 : vector<8xf32> to vector<8x1xf32>
    %117 = vector.broadcast %104 : f32 to vector<8x1xf32>
    %118 = arith.addf %116, %117 : vector<8x1xf32>
    %cst_33 = arith.constant 0.000000e+00 : f32
    %119 = vector.broadcast %cst_33 : f32 to vector<8x1xf32>
    %120 = arith.maximumf %118, %119 : vector<8x1xf32>
    %121 = vector.extract_strided_slice %100 {offsets = [0, 1], sizes = [8, 1], strides = [1, 1]} : vector<8x4xf32> to vector<8x1xf32>
    %122 = vector.broadcast %121 : vector<8x1xf32> to vector<8x32xf32>
    %123 = vector.broadcast %101 : vector<1x32xf32> to vector<8x32xf32>
    %124 = arith.mulf %122, %123 : vector<8x32xf32>
    %125 = vector.broadcast %102 : vector<1x32xf32> to vector<8x32xf32>
    %126 = arith.addf %124, %125 : vector<8x32xf32>
    %cst_34 = arith.constant 0.000000e+00 : f32
    %127 = vector.broadcast %cst_34 : f32 to vector<8x32xf32>
    %128 = arith.maximumf %126, %127 : vector<8x32xf32>
    %129 = vector.broadcast %103 : vector<1x32xf32> to vector<8x32xf32>
    %130 = arith.mulf %128, %129 : vector<8x32xf32>
    %cst_35 = arith.constant dense<0.000000e+00> : vector<8xf32>
    %131 = vector.multi_reduction <add>, %130, %cst_35 [1] : vector<8x32xf32> to vector<8xf32>
    %132 = vector.shape_cast %131 : vector<8xf32> to vector<8x1xf32>
    %133 = vector.broadcast %104 : f32 to vector<8x1xf32>
    %134 = arith.addf %132, %133 : vector<8x1xf32>
    %cst_36 = arith.constant 0.000000e+00 : f32
    %135 = vector.broadcast %cst_36 : f32 to vector<8x1xf32>
    %136 = arith.maximumf %134, %135 : vector<8x1xf32>
    %137 = vector.extract_strided_slice %100 {offsets = [0, 2], sizes = [8, 1], strides = [1, 1]} : vector<8x4xf32> to vector<8x1xf32>
    %138 = vector.broadcast %137 : vector<8x1xf32> to vector<8x32xf32>
    %139 = vector.broadcast %101 : vector<1x32xf32> to vector<8x32xf32>
    %140 = arith.mulf %138, %139 : vector<8x32xf32>
    %141 = vector.broadcast %102 : vector<1x32xf32> to vector<8x32xf32>
    %142 = arith.addf %140, %141 : vector<8x32xf32>
    %cst_37 = arith.constant 0.000000e+00 : f32
    %143 = vector.broadcast %cst_37 : f32 to vector<8x32xf32>
    %144 = arith.maximumf %142, %143 : vector<8x32xf32>
    %145 = vector.broadcast %103 : vector<1x32xf32> to vector<8x32xf32>
    %146 = arith.mulf %144, %145 : vector<8x32xf32>
    %cst_38 = arith.constant dense<0.000000e+00> : vector<8xf32>
    %147 = vector.multi_reduction <add>, %146, %cst_38 [1] : vector<8x32xf32> to vector<8xf32>
    %148 = vector.shape_cast %147 : vector<8xf32> to vector<8x1xf32>
    %149 = vector.broadcast %104 : f32 to vector<8x1xf32>
    %150 = arith.addf %148, %149 : vector<8x1xf32>
    %cst_39 = arith.constant 0.000000e+00 : f32
    %151 = vector.broadcast %cst_39 : f32 to vector<8x1xf32>
    %152 = arith.maximumf %150, %151 : vector<8x1xf32>
    %153 = vector.extract_strided_slice %100 {offsets = [0, 3], sizes = [8, 1], strides = [1, 1]} : vector<8x4xf32> to vector<8x1xf32>
    %154 = vector.broadcast %153 : vector<8x1xf32> to vector<8x32xf32>
    %155 = vector.broadcast %101 : vector<1x32xf32> to vector<8x32xf32>
    %156 = arith.mulf %154, %155 : vector<8x32xf32>
    %157 = vector.broadcast %102 : vector<1x32xf32> to vector<8x32xf32>
    %158 = arith.addf %156, %157 : vector<8x32xf32>
    %cst_40 = arith.constant 0.000000e+00 : f32
    %159 = vector.broadcast %cst_40 : f32 to vector<8x32xf32>
    %160 = arith.maximumf %158, %159 : vector<8x32xf32>
    %161 = vector.broadcast %103 : vector<1x32xf32> to vector<8x32xf32>
    %162 = arith.mulf %160, %161 : vector<8x32xf32>
    %cst_41 = arith.constant dense<0.000000e+00> : vector<8xf32>
    %163 = vector.multi_reduction <add>, %162, %cst_41 [1] : vector<8x32xf32> to vector<8xf32>
    %164 = vector.shape_cast %163 : vector<8xf32> to vector<8x1xf32>
    %165 = vector.broadcast %104 : f32 to vector<8x1xf32>
    %166 = arith.addf %164, %165 : vector<8x1xf32>
    %cst_42 = arith.constant 0.000000e+00 : f32
    %167 = vector.broadcast %cst_42 : f32 to vector<8x1xf32>
    %168 = arith.maximumf %166, %167 : vector<8x1xf32>
    %169 = tpu.concatenate %120, %136, %152, %168 in 1 : vector<8x1xf32>, vector<8x1xf32>, vector<8x1xf32>, vector<8x1xf32> -> vector<8x4xf32>
    %c0_43 = arith.constant 0 : index
    %c0_44 = arith.constant 0 : index
    %170 = vector.load %arg11[%c0_43, %c0_44] : memref<8x4xf32, #tpu.memory_space<vmem>>, vector<8x4xf32>
    tpu.vector_store %arg11[%c0_43, %c0_44], %169 {strides = array<i32>} : memref<8x4xf32, #tpu.memory_space<vmem>>, vector<8x4xf32>,
    return
  }
  func.func @transform_0(%arg0: i32) -> (i32, i32) {
    %c0_i32 = arith.constant 0 : i32
    %c0_i32_0 = arith.constant 0 : i32
    return %arg0, %c0_i32 : i32, i32
  }
  func.func @transform_1(%arg0: i32) -> (i32, i32) {
    %c0_i32 = arith.constant 0 : i32
    %c0_i32_0 = arith.constant 0 : i32
    return %arg0, %c0_i32 : i32, i32
  }
  func.func @transform_2(%arg0: i32) -> (i32, i32) {
    %c0_i32 = arith.constant 0 : i32
    %c0_i32_0 = arith.constant 0 : i32
    %c0_i32_1 = arith.constant 0 : i32
    return %c0_i32, %c0_i32_0 : i32, i32
  }
  func.func @transform_3(%arg0: i32) -> (i32, i32) {
    %c0_i32 = arith.constant 0 : i32
    %c0_i32_0 = arith.constant 0 : i32
    %c0_i32_1 = arith.constant 0 : i32
    return %c0_i32, %c0_i32_0 : i32, i32
  }
  func.func @transform_4(%arg0: i32) -> (i32, i32) {
    %c0_i32 = arith.constant 0 : i32
    %c0_i32_0 = arith.constant 0 : i32
    %c0_i32_1 = arith.constant 0 : i32
    return %c0_i32, %c0_i32_0 : i32, i32
  }
  func.func @transform_5(%arg0: i32) -> (i32, i32) {
    %c0_i32 = arith.constant 0 : i32
    %c0_i32_0 = arith.constant 0 : i32
    %c0_i32_1 = arith.constant 0 : i32
    return %c0_i32, %c0_i32_0 : i32, i32
  }
  func.func @transform_6(%arg0: i32) -> (i32, i32) {
    %c0_i32 = arith.constant 0 : i32
    %c0_i32_0 = arith.constant 0 : i32
    %c0_i32_1 = arith.constant 0 : i32
    return %c0_i32, %c0_i32_0 : i32, i32
  }
  func.func @transform_7(%arg0: i32) -> i32 {
    %c0_i32 = arith.constant 0 : i32
    %c0_i32_0 = arith.constant 0 : i32
    return %c0_i32 : i32
  }
  func.func @transform_8(%arg0: i32) -> (i32, i32) {
    %c0_i32 = arith.constant 0 : i32
    %c0_i32_0 = arith.constant 0 : i32
    return %arg0, %c0_i32 : i32, i32
  }
  func.func @transform_9(%arg0: i32) -> (i32, i32) {
    %c0_i32 = arith.constant 0 : i32
    %c0_i32_0 = arith.constant 0 : i32
    return %arg0, %c0_i32 : i32, i32
  }
  func.func @transform_10(%arg0: i32) -> (i32, i32) {
    %c0_i32 = arith.constant 0 : i32
    %c0_i32_0 = arith.constant 0 : i32
    return %arg0, %c0_i32 : i32, i32
  }
}

</mosaic_0001>

<llo_original>
// kernel: tpu_custom_call.1
$region0: #{tpu_custom_call.1}
  #allocation0 [shape = 'u32[]', space=smem, size = 0x4, offset = 0x4, fixed_abs, tag = 'smem constant byte address 0x4 - core index']
  #allocation1 [shape = 'u32[144,128]{1,0:T(1,128)}', space=vmem, size = 0x12000, scoped, tag = 'internal scratch']
  #allocation2 [shape = 'f32[1]{0:T(128)S(6)}', space=smem, size = 0x200, scoped, tag = 'scoped memory for tpu_custom_call.1']
  %s0 = inlined_call_operand.vmem [shape: f32[8,8], index: 0, kind: input, shape index: {}]
  %s1 = inlined_call_operand.vmem [shape: s32[8,1], index: 1, kind: input, shape index: {}]
  %s2 = inlined_call_operand.hbm [shape: f32[8,128], index: 2, kind: input, shape index: {}]
  %s3 = inlined_call_operand.vmem [shape: s32[1,128], index: 3, kind: input, shape index: {}]
  %s4 = inlined_call_operand.vmem [shape: f32[1,32], index: 4, kind: input, shape index: {}]
  %s5 = inlined_call_operand.vmem [shape: f32[1,32], index: 5, kind: input, shape index: {}]
  %s6 = inlined_call_operand.vmem [shape: f32[1,32], index: 6, kind: input, shape index: {}]
  %s7 = inlined_call_operand.<no memory space> [shape: f32[1], index: 7, kind: input, shape index: {}]
  %s8 = inlined_call_operand.vmem [shape: s32[8,4], index: 8, kind: output, shape index: {0}]
  %s9 = inlined_call_operand.vmem [shape: f32[8,4], index: 9, kind: output, shape index: {1}]
  %s10 = inlined_call_operand.vmem [shape: f32[8,4], index: 10, kind: output, shape index: {2}]
  %11 = xla_tuple %s8, %s9, %s10
  %s12 = sld [smem:[#allocation0]]
  $region62: #{tpu_custom_call.1} parent=0
    _
  %s14 = ssub.s32 1, %s12
  %s15 = scalar_select 0, %s14, %s12
  %16 = sst [smem:[#allocation2]] %s7
  $region1: #{tpu_custom_call.1} parent=0
    #allocation3 [shape = 'u8[4096]{0}', space=vmem, size = 0x1000, scoped, tag = 'input window, operand 2, single buffered']
    #allocation4 [shape = 's32[1]{0}', space=sflag, size = 0x4, scoped, tag = 'scoped memory for tpu_custom_call.1']
    %17 = vsyncpa [#allocation4], 0
    // Predicated region
    $region2: #{tpu_custom_call.1} parent=1 // pred_check
      _
    $region3: #{tpu_custom_call.1} parent=1 // pred_check_branch
      %19 = sbr.rel (0) target = $region5
    $region4: #{tpu_custom_call.1} parent=1 // pred_region
      _
    $region5: #{tpu_custom_call.1} parent=1 // pred_fallthru
      _
    // Predicated region
    $region6: #{tpu_custom_call.1} parent=1 // pred_check
      _
    $region7: #{tpu_custom_call.1} parent=1 // pred_check_branch
      %21 = sbr.rel (0) target = $region9
    $region8: #{tpu_custom_call.1} parent=1 // pred_region
      _
    $region9: #{tpu_custom_call.1} parent=1 // pred_fallthru
      _
    // Predicated region
    $region10: #{tpu_custom_call.1} parent=1 // pred_check
      _
    $region11: #{tpu_custom_call.1} parent=1 // pred_check_branch
      %23 = sbr.rel (0) target = $region13
    $region12: #{tpu_custom_call.1} parent=1 // pred_region
      %s25 = ssub.s32 128, 128
      %26 = vsyncadd [#allocation4], %s25
      %s28 = sshll.u32 [#allocation3], 4
      %s29 = int_to_ptr.vmem [resolvable:$true] %s28
      %31 = dma.hbm_to_vmem [thread:$0]  %s2, 128, %s29, [#allocation4]
    $region13: #{tpu_custom_call.1} parent=1 // pred_fallthru
      _
    // Predicated region
    $region14: #{tpu_custom_call.1} parent=1 // pred_check
      _
    $region15: #{tpu_custom_call.1} parent=1 // pred_check_branch
      %33 = sbr.rel (0) target = $region17
    $region16: #{tpu_custom_call.1} parent=1 // pred_region
      _
    $region17: #{tpu_custom_call.1} parent=1 // pred_fallthru
      _
    // Predicated region
    $region18: #{tpu_custom_call.1} parent=1 // pred_check
      _
    $region19: #{tpu_custom_call.1} parent=1 // pred_check_branch
      %35 = sbr.rel (0) target = $region21
    $region20: #{tpu_custom_call.1} parent=1 // pred_region
      _
    $region21: #{tpu_custom_call.1} parent=1 // pred_fallthru
      _
    // Predicated region
    $region22: #{tpu_custom_call.1} parent=1 // pred_check
      _
    $region23: #{tpu_custom_call.1} parent=1 // pred_check_branch
      %37 = sbr.rel (0) target = $region25
    $region24: #{tpu_custom_call.1} parent=1 // pred_region
      _
    $region25: #{tpu_custom_call.1} parent=1 // pred_fallthru
      _
    // Predicated region
    $region26: #{tpu_custom_call.1} parent=1 // pred_check
      _
    $region27: #{tpu_custom_call.1} parent=1 // pred_check_branch
      %39 = sbr.rel (0) target = $region29
    $region28: #{tpu_custom_call.1} parent=1 // pred_region
      _
    $region29: #{tpu_custom_call.1} parent=1 // pred_fallthru
      _
    // Predicated region
    $region30: #{tpu_custom_call.1} parent=1 // pred_check
      _
    $region31: #{tpu_custom_call.1} parent=1 // pred_check_branch
      %41 = sbr.rel (0) target = $region33
    $region32: #{tpu_custom_call.1} parent=1 // pred_region
      _
    $region33: #{tpu_custom_call.1} parent=1 // pred_fallthru
      _
    // Predicated region
    $region34: #{tpu_custom_call.1} parent=1 // pred_check
      _
    $region35: #{tpu_custom_call.1} parent=1 // pred_check_branch
      %43 = sbr.rel (0) target = $region37
    $region36: #{tpu_custom_call.1} parent=1 // pred_region
      %44 = dma.done [#allocation4], 128
    $region37: #{tpu_custom_call.1} parent=1 // pred_fallthru
      _
    %v45 = vld [vmem:[%s0] sm:$0xff]
    %v46 = vld [vmem:[%s1] sm:$0xff]
    %v47 = vld [vmem:[%s3] sm:$0x1]
    %v48 = vld [vmem:[#allocation3] sm:$0x1]
    %50 = vset.pattern.permute.xlu0 0
    %51 = vperm.xlu0 %50, %v45
    %v52 = vpop.permute.xlu0 %51
    %v54 = vlaneseq
    %v55 = vshrl.u32 %v54, 7
    %v56 = vsub.s32 0, %v55
    %v57 = vrot.slane %v48, %v56
    %v58 = vsub.f32 %v52, %v57
    %v59 = vmul.f32 %v58, %v58
    %v60 = vld [vmem:[#allocation3 + $0x1] sm:$0x1]
    %61 = vset.pattern.permute.xlu0 1
    %62 = vperm.xlu0 %61, %v45
    %v63 = vpop.permute.xlu0 %62
    %v65 = vlaneseq
    %v66 = vshrl.u32 %v65, 7
    %v67 = vsub.s32 0, %v66
    %v68 = vrot.slane %v60, %v67
    %v69 = vsub.f32 %v63, %v68
    %v70 = vmul.f32 %v69, %v69
    %v71 = vadd.f32 %v59, %v70
    %v72 = vld [vmem:[#allocation3 + $0x2] sm:$0x1]
    %73 = vset.pattern.permute.xlu0 2
    %74 = vperm.xlu0 %73, %v45
    %v75 = vpop.permute.xlu0 %74
    %v77 = vlaneseq
    %v78 = vshrl.u32 %v77, 7
    %v79 = vsub.s32 0, %v78
    %v80 = vrot.slane %v72, %v79
    %v81 = vsub.f32 %v75, %v80
    %v82 = vmul.f32 %v81, %v81
    %v83 = vadd.f32 %v71, %v82
    %84 = vset.pattern.permute.xlu0 0
    %85 = vperm.xlu0 %84, %v46
    %v86 = vpop.permute.xlu0 %85
    %v87 = vlaneseq
    %v88 = vshrl.u32 %v87, 7
    %v89 = vsub.s32 0, %v88
    %v90 = vrot.slane %v47, %v89
    %vm91 = vcmp.eq.s32.totalorder %v86, %v90
    %v92 = vsel %vm91, %v83, 1e+30
    %v93 = vlaneseq
    %v94 = vand.u32 %v93, 127
    %95 = vmin.xlane.f32.xlu0 %v92
    %v96 = vpop.xlane.xlu0 %95
    %vm97 = vcmp.eq.f32.partialorder %v92, %v96
    %v98 = vsel %vm97, %v94, 128
    %v99 = vand.u32 %v98, 65535
    %v100 = vshra.s32 %v98, 16
    %v101 = vcvt.s32.f32 %v99
    %v102 = vcvt.s32.f32 %v100
    %103 = vmin.xlane.f32.xlu0 %v102
    %v104 = vpop.xlane.xlu0 %103
    %vm105 = vcmp.eq.f32.partialorder %v102, %v104
    %v106 = vsel %vm105, %v101, inf
    %107 = vmin.xlane.f32.xlu0 %v106
    %v108 = vpop.xlane.xlu0 %107
    %v109 = vcvt.f32.s32 %v108
    %v110 = vcvt.f32.s32 %v104
    %v111 = vshll.u32 %v110, 16
    %v112 = vadd.s32 %v111, %v109
    %v113 = vrsqrt.pop %v96
    %v114 = vmul.f32 %v96, %v113
    %vm115 = vcmp.eq.f32.partialorder %v96, inf
    %v116 = vsel %vm115, %v96, %v114
    %vm117 = vcmp.eq.f32.partialorder %v96, 0.0
    %v118 = vand.u32 %v96, 2147483648
    %v119 = vsel %vm117, %v118, %v116
    %vm120 = vcmp.eq.s32.totalorder %v94, %v112
    %v121 = vsel %vm120, 1e+30, %v92
    %122 = vmin.xlane.f32.xlu0 %v121
    %v123 = vpop.xlane.xlu0 %122
    %vm124 = vcmp.eq.f32.partialorder %v121, %v123
    %v125 = vsel %vm124, %v94, 128
    %v126 = vand.u32 %v125, 65535
    %v127 = vshra.s32 %v125, 16
    %v128 = vcvt.s32.f32 %v126
    %v129 = vcvt.s32.f32 %v127
    %130 = vmin.xlane.f32.xlu0 %v129
    %v131 = vpop.xlane.xlu0 %130
    %vm132 = vcmp.eq.f32.partialorder %v129, %v131
    %v133 = vsel %vm132, %v128, inf
    %134 = vmin.xlane.f32.xlu0 %v133
    %v135 = vpop.xlane.xlu0 %134
    %v136 = vcvt.f32.s32 %v135
    %v137 = vcvt.f32.s32 %v131
    %v138 = vshll.u32 %v137, 16
    %v139 = vadd.s32 %v138, %v136
    %v140 = vrsqrt.pop %v123
    %v141 = vmul.f32 %v123, %v140
    %vm142 = vcmp.eq.f32.partialorder %v123, inf
    %v143 = vsel %vm142, %v123, %v141
    %vm144 = vcmp.eq.f32.partialorder %v123, 0.0
    %v145 = vand.u32 %v123, 2147483648
    %v146 = vsel %vm144, %v145, %v143
    %vm147 = vcmp.eq.s32.totalorder %v94, %v139
    %v148 = vsel %vm147, 1e+30, %v121
    %149 = vmin.xlane.f32.xlu0 %v148
    %v150 = vpop.xlane.xlu0 %149
    %vm151 = vcmp.eq.f32.partialorder %v148, %v150
    %v152 = vsel %vm151, %v94, 128
    %v153 = vand.u32 %v152, 65535
    %v154 = vshra.s32 %v152, 16
    %v155 = vcvt.s32.f32 %v153
    %v156 = vcvt.s32.f32 %v154
    %157 = vmin.xlane.f32.xlu0 %v156
    %v158 = vpop.xlane.xlu0 %157
    %vm159 = vcmp.eq.f32.partialorder %v156, %v158
    %v160 = vsel %vm159, %v155, inf
    %161 = vmin.xlane.f32.xlu0 %v160
    %v162 = vpop.xlane.xlu0 %161
    %v163 = vcvt.f32.s32 %v162
    %v164 = vcvt.f32.s32 %v158
    %v165 = vshll.u32 %v164, 16
    %v166 = vadd.s32 %v165, %v163
    %v167 = vrsqrt.pop %v150
    %v168 = vmul.f32 %v150, %v167
    %vm169 = vcmp.eq.f32.partialorder %v150, inf
    %v170 = vsel %vm169, %v150, %v168
    %vm171 = vcmp.eq.f32.partialorder %v150, 0.0
    %v172 = vand.u32 %v150, 2147483648
    %v173 = vsel %vm171, %v172, %v170
    %vm174 = vcmp.eq.s32.totalorder %v94, %v166
    %v175 = vsel %vm174, 1e+30, %v148
    %176 = vmin.xlane.f32.xlu0 %v175
    %v177 = vpop.xlane.xlu0 %176
    %vm178 = vcmp.eq.f32.partialorder %v175, %v177
    %v179 = vsel %vm178, %v94, 128
    %v180 = vand.u32 %v179, 65535
    %v181 = vshra.s32 %v179, 16
    %v182 = vcvt.s32.f32 %v180
    %v183 = vcvt.s32.f32 %v181
    %184 = vmin.xlane.f32.xlu0 %v183
    %v185 = vpop.xlane.xlu0 %184
    %vm186 = vcmp.eq.f32.partialorder %v183, %v185
    %v187 = vsel %vm186, %v182, inf
    %188 = vmin.xlane.f32.xlu0 %v187
    %v189 = vpop.xlane.xlu0 %188
    %v190 = vcvt.f32.s32 %v189
    %v191 = vcvt.f32.s32 %v185
    %v192 = vshll.u32 %v191, 16
    %v193 = vadd.s32 %v192, %v190
    %v194 = vrsqrt.pop %v177
    %v195 = vmul.f32 %v177, %v194
    %vm196 = vcmp.eq.f32.partialorder %v177, inf
    %v197 = vsel %vm196, %v177, %v195
    %vm198 = vcmp.eq.f32.partialorder %v177, 0.0
    %v199 = vand.u32 %v177, 2147483648
    %v200 = vsel %vm198, %v199, %v197
    %vm201 = vcmask 7168
    %v202 = vsel %vm201, %v112, %v139
    %vm203 = vcmask 15360
    %v204 = vsel %vm203, %v202, %v166
    %vm205 = vcmask 23552
    %v206 = vsel %vm205, %v204, %v193
    %vm207 = vcmask 31744
    %208 = vst.msk [vmem:[%s8] sm:$0xff] %vm207, %v206
    %v209 = vsel %vm201, %v119, %v146
    %v210 = vsel %vm203, %v209, %v173
    %v211 = vsel %vm205, %v210, %v200
    %212 = vst.msk [vmem:[%s9] sm:$0xff] %vm207, %v211
    %v213 = vld [vmem:[%s9] sm:$0xff]
    %v214 = vld [vmem:[%s4] sm:$0x1]
    %v215 = vld [vmem:[%s5] sm:$0x1]
    %v216 = vld [vmem:[%s6] sm:$0x1]
    %s217 = sld [smem:[#allocation2]]
    %219 = vset.pattern.permute.xlu0 0
    %220 = vperm.xlu0 %219, %v213
    %v221 = vpop.permute.xlu0 %220
    %v224 = vlaneseq
    %v225 = vshrl.u32 %v224, 7
    %v226 = vsub.s32 0, %v225
    %v227 = vrot.slane %v214, %v226
    %v229 = vmul.f32 %v221, %v227
    %v231 = vlaneseq
    %v232 = vshrl.u32 %v231, 7
    %v233 = vsub.s32 0, %v232
    %v234 = vrot.slane %v215, %v233
    %v236 = vadd.f32 %v229, %v234
    %v237 = vmax.f32 %v236, 0.0
    %v239 = vlaneseq
    %v240 = vshrl.u32 %v239, 7
    %v241 = vsub.s32 0, %v240
    %v242 = vrot.slane %v216, %v241
    %v244 = vmul.f32 %v237, %v242
    %vm245 = vcmask 261120
    %v246 = vsel %vm245, %v244, 0.0
    %247 = vadd.xlane.f32.xlu0 %v246
    %v248 = vpop.xlane.xlu0 %247
    %v249 = vstv %s217
    %v250 = vadd.f32 %v248, %v249
    %v251 = vmax.f32 %v250, 0.0
    %252 = vset.pattern.permute.xlu0 1
    %253 = vperm.xlu0 %252, %v213
    %v254 = vpop.permute.xlu0 %253
    %v256 = vmul.f32 %v254, %v227
    %v257 = vadd.f32 %v256, %v234
    %v258 = vmax.f32 %v257, 0.0
    %v259 = vmul.f32 %v258, %v242
    %v260 = vsel %vm245, %v259, 0.0
    %261 = vadd.xlane.f32.xlu0 %v260
    %v262 = vpop.xlane.xlu0 %261
    %v263 = vadd.f32 %v262, %v249
    %v264 = vmax.f32 %v263, 0.0
    %265 = vset.pattern.permute.xlu0 2
    %266 = vperm.xlu0 %265, %v213
    %v267 = vpop.permute.xlu0 %266
    %v269 = vmul.f32 %v267, %v227
    %v270 = vadd.f32 %v269, %v234
    %v271 = vmax.f32 %v270, 0.0
    %v272 = vmul.f32 %v271, %v242
    %v273 = vsel %vm245, %v272, 0.0
    %274 = vadd.xlane.f32.xlu0 %v273
    %v275 = vpop.xlane.xlu0 %274
    %v276 = vadd.f32 %v275, %v249
    %v277 = vmax.f32 %v276, 0.0
    %278 = vset.pattern.permute.xlu0 3
    %279 = vperm.xlu0 %278, %v213
    %v280 = vpop.permute.xlu0 %279
    %v282 = vmul.f32 %v280, %v227
    %v283 = vadd.f32 %v282, %v234
    %v284 = vmax.f32 %v283, 0.0
    %v285 = vmul.f32 %v284, %v242
    %v286 = vsel %vm245, %v285, 0.0
    %287 = vadd.xlane.f32.xlu0 %v286
    %v288 = vpop.xlane.xlu0 %287
    %v289 = vadd.f32 %v288, %v249
    %v290 = vmax.f32 %v289, 0.0
    %v291 = vsel %vm201, %v251, %v264
    %v292 = vsel %vm203, %v291, %v277
    %v293 = vsel %vm205, %v292, %v290
    %294 = vst.msk [vmem:[%s10] sm:$0xff] %vm207, %v293
    // Predicated region
    $region38: #{tpu_custom_call.1} parent=1 // pred_check
      _
    $region39: #{tpu_custom_call.1} parent=1 // pred_check_branch
      %296 = sbr.rel (0) target = $region41
    $region40: #{tpu_custom_call.1} parent=1 // pred_region
      _
    $region41: #{tpu_custom_call.1} parent=1 // pred_fallthru
      _
    // Predicated region
    $region42: #{tpu_custom_call.1} parent=1 // pred_check
      _
    $region43: #{tpu_custom_call.1} parent=1 // pred_check_branch
      %298 = sbr.rel (0) target = $region45
    $region44: #{tpu_custom_call.1} parent=1 // pred_region
      _
    $region45: #{tpu_custom_call.1} parent=1 // pred_fallthru
      _
    // Predicated region
    $region46: #{tpu_custom_call.1} parent=1 // pred_check
      _
    $region47: #{tpu_custom_call.1} parent=1 // pred_check_branch
      %300 = sbr.rel (0) target = $region49
    $region48: #{tpu_custom_call.1} parent=1 // pred_region
      _
    $region49: #{tpu_custom_call.1} parent=1 // pred_fallthru
      _
    // Predicated region
    $region50: #{tpu_custom_call.1} parent=1 // pred_check
      _
    $region51: #{tpu_custom_call.1} parent=1 // pred_check_branch
      %302 = sbr.rel (0) target = $region53
    $region52: #{tpu_custom_call.1} parent=1 // pred_region
      _
    $region53: #{tpu_custom_call.1} parent=1 // pred_fallthru
      _
    // Predicated region
    $region54: #{tpu_custom_call.1} parent=1 // pred_check
      _
    $region55: #{tpu_custom_call.1} parent=1 // pred_check_branch
      %304 = sbr.rel (0) target = $region57
    $region56: #{tpu_custom_call.1} parent=1 // pred_region
      _
    $region57: #{tpu_custom_call.1} parent=1 // pred_fallthru
      _
    // Predicated region
    $region58: #{tpu_custom_call.1} parent=1 // pred_check
      _
    $region59: #{tpu_custom_call.1} parent=1 // pred_check_branch
      %306 = sbr.rel (0) target = $region61
    $region60: #{tpu_custom_call.1} parent=1 // pred_region
      _
    $region61: #{tpu_custom_call.1} parent=1 // pred_fallthru
      _
    %307 = vsyncpa [#allocation4], 1

</llo_original>
